<compile_context>
chip_gen: v7x
topology: tpu7x:2x2x1
jax: 0.10.0
libtpu: 0.0.40
codegen_flags: <defaults>
</compile_context>

<pallas_src>
import functools

import jax
import jax.numpy as jnp
from jax.experimental import pallas as pl
from jax.experimental.pallas import tpu as pltpu

NEG_SLOPE = 0.2    # PyG GATConv default negative_slope
BN_EPS = 1e-5      # nn.BatchNorm1d default eps
NEG_BIG = -1e30    # finite "-inf" for masked logits (avoids inf-inf NaNs)


def _round_up(x, m):
    return (x + m - 1) // m * m


def _pad2(a, rows, cols):
    return jnp.pad(a, ((0, rows - a.shape[0]), (0, cols - a.shape[1])))


def _hw_config():
    """Generation-aware VMEM budget and max tile sizes.

    v5e / v6e have 128 MiB of VMEM per TensorCore, v7x only 64 MiB, so the
    vmem_limit and the destination/source tile caps are derived from the
    reported capacity instead of being hard-coded.
    """
    cap = 64 * 1024 * 1024
    try:
        cap = int(pltpu.get_tpu_info().vmem_capacity_bytes)
    except Exception:
        pass
    if cap >= 120 * 1024 * 1024:              # v5e / v6e class parts
        return 100 * 1024 * 1024, 512, 512    # (vmem_limit, TM_max, TK_max)
    return 48 * 1024 * 1024, 256, 512         # v7x class parts: keep DMA headroom


def _pick_tile(n_pad, t_max):
    t = min(t_max, n_pad)
    while n_pad % t:
        t -= 128
    return t


def _invariant_spec(block_shape, index_map):
    # Grid-invariant operand: single-buffer it (double-buffering a block whose
    # index_map never changes only doubles its VMEM footprint, no overlap gain).
    try:
        return pl.BlockSpec(block_shape, index_map, pipeline_mode=pl.Buffered(1))
    except Exception:  # older jax: no pipeline_mode / Buffered(1) rejected
        return pl.BlockSpec(block_shape, index_map)


# ---------------- Kernel A: node transform --------------------------------------
def transform_kernel(x_ref, w_lin_ref, att_src_ref, att_dst_ref, bn_scale_ref,
                     ones_col_ref, h_ref, a_src_ref, a_dst_ref):
    # h = x @ W  (bf16 operands, f32 accumulate on the MXU)
    h = jnp.dot(x_ref[...], w_lin_ref[...], preferred_element_type=jnp.float32)
    # attention logit contributions as VPU lane reductions (no 1-lane matmuls)
    a_src_ref[...] = jnp.sum(h * att_src_ref[...], axis=-1, keepdims=True)
    a_dst_ref[...] = jnp.sum(h * att_dst_ref[...], axis=-1, keepdims=True)
    # fold the BatchNorm per-channel scale into h and plant 1.0 in a spare padded
    # column (ones_col, written AFTER the scale so padded-zero scale can't kill it);
    # kernel B then gets the softmax denominator from the aggregation matmul.
    h_ref[...] = (h * bn_scale_ref[...] + ones_col_ref[...]).astype(jnp.bfloat16)


# ---------------- Kernel B: source-tiled online-softmax attention ---------------
def attention_kernel(adj_ref, a_dst_ref, a_src_ref, h_ref, shift_ref,
                     w_fc_ref, b_fc_ref, out_ref, m_scr, l_scr, acc_scr,
                     *, denom_col):
    k = pl.program_id(1)

    @pl.when(k == 0)
    def _():
        m_scr[...] = jnp.full_like(m_scr, NEG_BIG)
        l_scr[...] = jnp.zeros_like(l_scr)
        acc_scr[...] = jnp.zeros_like(acc_scr)

    # e[i, j] = LeakyReLU(a_dst[i] + a_src[j]) on edges, -1e30 elsewhere.
    # (Every real row has a self-loop, so each row sees at least one finite logit.)
    e = a_dst_ref[...] + a_src_ref[...]                        # (TM, TK) f32
    e = jnp.maximum(e, NEG_SLOPE * e)                          # leaky relu: mul+max
    e = jnp.where(adj_ref[...] != 0, e, jnp.float32(NEG_BIG))

    # online softmax over source chunks
    m_prev = m_scr[...]
    m_new = jnp.maximum(m_prev, jnp.max(e, axis=-1, keepdims=True))
    alpha = jnp.exp(m_prev - m_new)                            # (TM, 1)
    p = jnp.exp(e - m_new)                                     # (TM, TK)
    acc_scr[...] = alpha * acc_scr[...] + jnp.dot(
        p.astype(jnp.bfloat16), h_ref[...], preferred_element_type=jnp.float32)
    m_scr[...] = m_new
    if denom_col is None:
        # no spare padded column available: keep an explicit running denominator
        l_scr[...] = alpha * l_scr[...] + jnp.sum(p, axis=-1, keepdims=True)

    @pl.when(k == pl.num_programs(1) - 1)
    def _():
        acc = acc_scr[...]
        if denom_col is None:
            l = l_scr[...]
        else:
            # denominator was accumulated by the MXU in the spare ones-column
            lane = jax.lax.broadcasted_iota(jnp.int32, acc.shape, 1)
            l = jnp.sum(jnp.where(lane == denom_col, acc, 0.0),
                        axis=-1, keepdims=True)
        v = acc * pl.reciprocal(l, approx=True) + shift_ref[...]  # conv bias + BN
        v = jnp.maximum(v, 0.0)                                    # ReLU
        # TODO(synk): F.dropout is identity in eval mode (training=False); skipped.
        out_ref[...] = (jnp.dot(v.astype(jnp.bfloat16), w_fc_ref[...],
                                preferred_element_type=jnp.float32) + b_fc_ref[...])


def gat_model_forward(x, edge_index, params):
    N, in_feats = x.shape
    hidden = params["w_lin"].shape[1]
    out_feats = params["w_fc"].shape[1]

    vmem_limit, tm_max, tk_max = _hw_config()

    Np = _round_up(N, 128)          # node rows (and adjacency lanes)
    Fp = _round_up(in_feats, 128)   # lane-dense input features
    Hp = _round_up(hidden, 128)     # lane-dense hidden
    Op = _round_up(out_feats, 128)  # lane-dense output (unmasked vst)
    TM = _pick_tile(Np, tm_max)     # destination-row tile
    TK = _pick_tile(Np, tk_max)     # source-node chunk
    denom_col = hidden if hidden < Hp else None   # spare padded column for denom

    # ---- glue (plain JAX): padding, dense int8 adjacency, folded BN affine ----
    x_p = _pad2(x, Np, Fp).astype(jnp.bfloat16)
    w_lin_p = _pad2(params["w_lin"], Fp, Hp).astype(jnp.bfloat16)

    src, dst = edge_index[0], edge_index[1]
    # TODO(synk): for very large sparse graphs, replace the dense O(N^2) int8
    # adjacency with CSR chunks + PrefetchScalarGridSpec so all-empty (TM, TK)
    # blocks are skipped and HBM traffic scales with E instead of N^2.
    adj = jnp.zeros((Np, Np), jnp.int8).at[dst, src].set(1)   # adj[i, j]: edge j -> i
    idx = jnp.arange(Np)
    adj = adj.at[idx, idx].set(1)          # self loops (PyG add_self_loops default)

    bn_scale = params["gamma"] * jax.lax.rsqrt(params["var"] + BN_EPS)
    bn_shift = (params["b_conv"] - params["mean"]) * bn_scale + params["beta"]

    att_src_p = _pad2(params["att_src"], 1, Hp)
    att_dst_p = _pad2(params["att_dst"], 1, Hp)
    bn_scale_p = _pad2(bn_scale, 1, Hp)
    bn_shift_p = _pad2(bn_shift, 1, Hp)
    w_fc_p = _pad2(params["w_fc"], Hp, Op).astype(jnp.bfloat16)
    b_fc_p = _pad2(params["b_fc"], 1, Op)
    ones_col = jnp.zeros((1, Hp), jnp.float32)
    if denom_col is not None:
        ones_col = ones_col.at[0, denom_col].set(1.0)

    # ---- kernel A: tiled node transform ----
    h_scaled, a_src_col, a_dst_col = pl.pallas_call(
        transform_kernel,
        out_shape=(jax.ShapeDtypeStruct((Np, Hp), jnp.bfloat16),
                   jax.ShapeDtypeStruct((Np, 1), jnp.float32),
                   jax.ShapeDtypeStruct((Np, 1), jnp.float32)),
        grid=(Np // TM,),
        in_specs=[pl.BlockSpec((TM, Fp), lambda i: (i, 0)),
                  _invariant_spec((Fp, Hp), lambda i: (0, 0)),   # weights resident
                  _invariant_spec((1, Hp), lambda i: (0, 0)),
                  _invariant_spec((1, Hp), lambda i: (0, 0)),
                  _invariant_spec((1, Hp), lambda i: (0, 0)),
                  _invariant_spec((1, Hp), lambda i: (0, 0))],
        out_specs=(pl.BlockSpec((TM, Hp), lambda i: (i, 0)),
                   pl.BlockSpec((TM, 1), lambda i: (i, 0)),
                   pl.BlockSpec((TM, 1), lambda i: (i, 0))),
        compiler_params=pltpu.CompilerParams(
            dimension_semantics=("parallel",), vmem_limit_bytes=vmem_limit),
    )(x_p, w_lin_p, att_src_p, att_dst_p, bn_scale_p, ones_col)

    # a_src must broadcast along lanes in kernel B; this (Np,1)->(1,Np) relayout is
    # Np*4 bytes (negligible vs the adjacency traffic) and is kept in the wrapper
    # instead of an in-kernel sublane->lane transpose for lowering robustness.
    a_src_row = a_src_col.reshape(1, Np)

    # ---- kernel B: online-softmax attention + BN/ReLU/Linear epilogue ----
    out_p = pl.pallas_call(
        functools.partial(attention_kernel, denom_col=denom_col),
        out_shape=jax.ShapeDtypeStruct((Np, Op), jnp.float32),
        grid=(Np // TM, Np // TK),
        in_specs=[pl.BlockSpec((TM, TK), lambda i, k: (i, k)),     # adj block (int8)
                  pl.BlockSpec((TM, 1), lambda i, k: (i, 0)),      # a_dst tile
                  pl.BlockSpec((1, TK), lambda i, k: (0, k)),      # a_src chunk (row)
                  pl.BlockSpec((TK, Hp), lambda i, k: (k, 0)),     # h_scaled chunk bf16
                  _invariant_spec((1, Hp), lambda i, k: (0, 0)),   # conv bias + BN shift
                  _invariant_spec((Hp, Op), lambda i, k: (0, 0)),  # w_fc bf16
                  _invariant_spec((1, Op), lambda i, k: (0, 0))],  # b_fc
        out_specs=pl.BlockSpec((TM, Op), lambda i, k: (i, 0)),
        scratch_shapes=[pltpu.VMEM((TM, 1), jnp.float32),    # running max
                        pltpu.VMEM((TM, 1), jnp.float32),    # running denom (fallback)
                        pltpu.VMEM((TM, Hp), jnp.float32)],  # running aggregation
        compiler_params=pltpu.CompilerParams(
            dimension_semantics=("parallel", "arbitrary"),
            vmem_limit_bytes=vmem_limit),
    )(adj, a_dst_col, a_src_row, h_scaled, bn_shift_p, w_fc_p, b_fc_p)

    return out_p[:N, :out_feats]


# ---------------- plain-JAX reference (f32) for a tolerance check ---------------
def gat_model_reference(x, edge_index, params):
    N = x.shape[0]
    src, dst = edge_index[0], edge_index[1]
    adj = jnp.zeros((N, N), jnp.float32).at[dst, src].set(1.0)
    adj = adj.at[jnp.arange(N), jnp.arange(N)].set(1.0)
    h = x @ params["w_lin"]
    a_src = jnp.sum(h * params["att_src"], axis=-1)
    a_dst = jnp.sum(h * params["att_dst"], axis=-1)
    e = a_dst[:, None] + a_src[None, :]
    e = jnp.where(e > 0, e, NEG_SLOPE * e)
    e = jnp.where(adj > 0, e, -jnp.inf)
    attn = jax.nn.softmax(e, axis=-1)
    v = attn @ h + params["b_conv"]
    v = ((v - params["mean"]) * jax.lax.rsqrt(params["var"] + BN_EPS)
         * params["gamma"] + params["beta"])
    v = jnp.maximum(v, 0.0)
    return v @ params["w_fc"] + params["b_fc"]


if __name__ == "__main__":
    # Small, deterministic synthetic problem.
    N, in_feats, hidden_feats, out_feats, E = 16, 8, 32, 4, 40

    key = jax.random.PRNGKey(0)
    keys = jax.random.split(key, 10)

    x = jax.random.normal(keys[0], (N, in_feats), jnp.float32)
    edge_index = jax.random.randint(keys[1], (2, E), 0, N)   # [2, E] (src; dst)

    params = dict(
        # GATConv parameters (heads=1): lin weight, att_src, att_dst, bias
        w_lin=0.1 * jax.random.normal(keys[2], (in_feats, hidden_feats), jnp.float32),
        att_src=0.1 * jax.random.normal(keys[3], (1, hidden_feats), jnp.float32),
        att_dst=0.1 * jax.random.normal(keys[4], (1, hidden_feats), jnp.float32),
        b_conv=jnp.zeros((1, hidden_feats), jnp.float32),
        # BatchNorm1d parameters + running stats
        gamma=jnp.ones((1, hidden_feats), jnp.float32),
        beta=jnp.zeros((1, hidden_feats), jnp.float32),
        mean=0.05 * jax.random.normal(keys[5], (1, hidden_feats), jnp.float32),
        var=jax.random.uniform(keys[6], (1, hidden_feats), jnp.float32,
                               minval=0.5, maxval=1.5),
        # fc (Linear) parameters
        w_fc=0.1 * jax.random.normal(keys[7], (hidden_feats, out_feats), jnp.float32),
        b_fc=0.1 * jax.random.normal(keys[8], (1, out_feats), jnp.float32),
    )

    y = gat_model_forward(x, edge_index, params)
    jax.block_until_ready(y)
    assert y.shape == (N, out_feats) and y.dtype == jnp.float32

    y_ref = gat_model_reference(x, edge_index, params)
    max_err = float(jnp.max(jnp.abs(y - y_ref)))
    assert max_err < 5e-2, f"max abs err {max_err} vs f32 reference"

    print("KERNEL_OK")
</pallas_src>

<mosaic_0001>
module attributes {stable_mosaic.version = 11 : i64} {
  func.func @transform_kernel(%arg0: i32, %arg1: memref<128x128xbf16, #tpu.memory_space<vmem>>, %arg2: memref<128x128xbf16, #tpu.memory_space<vmem>>, %arg3: memref<1x128xf32, #tpu.memory_space<vmem>>, %arg4: memref<1x128xf32, #tpu.memory_space<vmem>>, %arg5: memref<1x128xf32, #tpu.memory_space<vmem>>, %arg6: memref<1x128xf32, #tpu.memory_space<vmem>>, %arg7: memref<128x128xbf16, #tpu.memory_space<vmem>>, %arg8: memref<128x1xf32, #tpu.memory_space<vmem>>, %arg9: memref<128x1xf32, #tpu.memory_space<vmem>>) attributes {dimension_semantics = [#tpu.dimension_semantics<parallel>], iteration_bounds = array<i64: 1>, scalar_prefetch = 0 : i64, scratch_operands = 0 : i64, tpu.core_type = #tpu.core_type<tc>, window_params = [{transform_indices = @transform_0, window_bounds = array<i64: 128, 128>}, {pipeline_mode = #tpu.pipeline_mode<synchronous>, transform_indices = @transform_1, window_bounds = array<i64: 128, 128>}, {pipeline_mode = #tpu.pipeline_mode<synchronous>, transform_indices = @transform_2, window_bounds = array<i64: 1, 128>}, {pipeline_mode = #tpu.pipeline_mode<synchronous>, transform_indices = @transform_3, window_bounds = array<i64: 1, 128>}, {pipeline_mode = #tpu.pipeline_mode<synchronous>, transform_indices = @transform_4, window_bounds = array<i64: 1, 128>}, {pipeline_mode = #tpu.pipeline_mode<synchronous>, transform_indices = @transform_5, window_bounds = array<i64: 1, 128>}, {transform_indices = @transform_6, window_bounds = array<i64: 128, 128>}, {transform_indices = @transform_7, window_bounds = array<i64: 128, 1>}, {transform_indices = @transform_8, window_bounds = array<i64: 128, 1>}]} {
    %c0 = arith.constant 0 : index
    %c0_0 = arith.constant 0 : index
    %0 = vector.load %arg1[%c0, %c0_0] : memref<128x128xbf16, #tpu.memory_space<vmem>>, vector<128x128xbf16>
    %c0_1 = arith.constant 0 : index
    %c0_2 = arith.constant 0 : index
    %1 = vector.load %arg2[%c0_1, %c0_2] : memref<128x128xbf16, #tpu.memory_space<vmem>>, vector<128x128xbf16>
    %cst = arith.constant dense<0.000000e+00> : vector<128x128xf32>
    %2 = tpu.matmul %0, %1, %cst {dimension_numbers = #tpu.dot_dimension_numbers<[1], [0], [0], [1], [0, 0, 1, 1], [], []>} : vector<128x128xbf16>, vector<128x128xbf16>, vector<128x128xf32> -> vector<128x128xf32>
    %c0_3 = arith.constant 0 : index
    %c0_4 = arith.constant 0 : index
    %3 = vector.load %arg3[%c0_3, %c0_4] : memref<1x128xf32, #tpu.memory_space<vmem>>, vector<1x128xf32>
    %4 = vector.broadcast %3 : vector<1x128xf32> to vector<128x128xf32>
    %5 = arith.mulf %2, %4 : vector<128x128xf32>
    %cst_5 = arith.constant dense<0.000000e+00> : vector<128xf32>
    %6 = vector.multi_reduction <add>, %5, %cst_5 [1] : vector<128x128xf32> to vector<128xf32>
    %7 = vector.shape_cast %6 : vector<128xf32> to vector<128x1xf32>
    %c0_6 = arith.constant 0 : index
    %c0_7 = arith.constant 0 : index
    %8 = vector.load %arg8[%c0_6, %c0_7] : memref<128x1xf32, #tpu.memory_space<vmem>>, vector<128x1xf32>
    tpu.vector_store %arg8[%c0_6, %c0_7], %7 {strides = array<i32>} : memref<128x1xf32, #tpu.memory_space<vmem>>, vector<128x1xf32>,
    %c0_8 = arith.constant 0 : index
    %c0_9 = arith.constant 0 : index
    %9 = vector.load %arg4[%c0_8, %c0_9] : memref<1x128xf32, #tpu.memory_space<vmem>>, vector<1x128xf32>
    %10 = vector.broadcast %9 : vector<1x128xf32> to vector<128x128xf32>
    %11 = arith.mulf %2, %10 : vector<128x128xf32>
    %cst_10 = arith.constant dense<0.000000e+00> : vector<128xf32>
    %12 = vector.multi_reduction <add>, %11, %cst_10 [1] : vector<128x128xf32> to vector<128xf32>
    %13 = vector.shape_cast %12 : vector<128xf32> to vector<128x1xf32>
    %c0_11 = arith.constant 0 : index
    %c0_12 = arith.constant 0 : index
    %14 = vector.load %arg9[%c0_11, %c0_12] : memref<128x1xf32, #tpu.memory_space<vmem>>, vector<128x1xf32>
    tpu.vector_store %arg9[%c0_11, %c0_12], %13 {strides = array<i32>} : memref<128x1xf32, #tpu.memory_space<vmem>>, vector<128x1xf32>,
    %c0_13 = arith.constant 0 : index
    %c0_14 = arith.constant 0 : index
    %15 = vector.load %arg5[%c0_13, %c0_14] : memref<1x128xf32, #tpu.memory_space<vmem>>, vector<1x128xf32>
    %16 = vector.broadcast %15 : vector<1x128xf32> to vector<128x128xf32>
    %17 = arith.mulf %2, %16 : vector<128x128xf32>
    %c0_15 = arith.constant 0 : index
    %c0_16 = arith.constant 0 : index
    %18 = vector.load %arg6[%c0_15, %c0_16] : memref<1x128xf32, #tpu.memory_space<vmem>>, vector<1x128xf32>
    %19 = vector.broadcast %18 : vector<1x128xf32> to vector<128x128xf32>
    %20 = arith.addf %17, %19 : vector<128x128xf32>
    %21 = arith.truncf %20 : vector<128x128xf32> to vector<128x128xbf16>
    %c0_17 = arith.constant 0 : index
    %c0_18 = arith.constant 0 : index
    %22 = vector.load %arg7[%c0_17, %c0_18] : memref<128x128xbf16, #tpu.memory_space<vmem>>, vector<128x128xbf16>
    tpu.vector_store %arg7[%c0_17, %c0_18], %21 {strides = array<i32>} : memref<128x128xbf16, #tpu.memory_space<vmem>>, vector<128x128xbf16>,
    return
  }
  func.func @transform_0(%arg0: i32) -> (i32, i32) {
    %c0_i32 = arith.constant 0 : i32
    %c0_i32_0 = arith.constant 0 : i32
    return %arg0, %c0_i32 : i32, i32
  }
  func.func @transform_1(%arg0: i32) -> (i32, i32) {
    %c0_i32 = arith.constant 0 : i32
    %c0_i32_0 = arith.constant 0 : i32
    %c0_i32_1 = arith.constant 0 : i32
    return %c0_i32, %c0_i32_0 : i32, i32
  }
  func.func @transform_2(%arg0: i32) -> (i32, i32) {
    %c0_i32 = arith.constant 0 : i32
    %c0_i32_0 = arith.constant 0 : i32
    %c0_i32_1 = arith.constant 0 : i32
    return %c0_i32, %c0_i32_0 : i32, i32
  }
  func.func @transform_3(%arg0: i32) -> (i32, i32) {
    %c0_i32 = arith.constant 0 : i32
    %c0_i32_0 = arith.constant 0 : i32
    %c0_i32_1 = arith.constant 0 : i32
    return %c0_i32, %c0_i32_0 : i32, i32
  }
  func.func @transform_4(%arg0: i32) -> (i32, i32) {
    %c0_i32 = arith.constant 0 : i32
    %c0_i32_0 = arith.constant 0 : i32
    %c0_i32_1 = arith.constant 0 : i32
    return %c0_i32, %c0_i32_0 : i32, i32
  }
  func.func @transform_5(%arg0: i32) -> (i32, i32) {
    %c0_i32 = arith.constant 0 : i32
    %c0_i32_0 = arith.constant 0 : i32
    %c0_i32_1 = arith.constant 0 : i32
    return %c0_i32, %c0_i32_0 : i32, i32
  }
  func.func @transform_6(%arg0: i32) -> (i32, i32) {
    %c0_i32 = arith.constant 0 : i32
    %c0_i32_0 = arith.constant 0 : i32
    return %arg0, %c0_i32 : i32, i32
  }
  func.func @transform_7(%arg0: i32) -> (i32, i32) {
    %c0_i32 = arith.constant 0 : i32
    %c0_i32_0 = arith.constant 0 : i32
    return %arg0, %c0_i32 : i32, i32
  }
  func.func @transform_8(%arg0: i32) -> (i32, i32) {
    %c0_i32 = arith.constant 0 : i32
    %c0_i32_0 = arith.constant 0 : i32
    return %arg0, %c0_i32 : i32, i32
  }
}

</mosaic_0001>

<llo_original>
// kernel: tpu_custom_call.1
$region0: #{tpu_custom_call.1}
  #allocation0 [shape = 'u32[]', space=smem, size = 0x4, offset = 0x4, fixed_abs, tag = 'smem constant byte address 0x4 - core index']
  #allocation1 [shape = 'u32[144,128]{1,0:T(1,128)}', space=vmem, size = 0x12000, scoped, tag = 'internal scratch']
  %s0 = inlined_call_operand.hbm [shape: bf16[128,128], index: 0, kind: input, shape index: {}]
  %s1 = inlined_call_operand.hbm [shape: bf16[128,128], index: 1, kind: input, shape index: {}]
  %s2 = inlined_call_operand.vmem [shape: f32[1,128], index: 2, kind: input, shape index: {}]
  %s3 = inlined_call_operand.vmem [shape: f32[1,128], index: 3, kind: input, shape index: {}]
  %s4 = inlined_call_operand.vmem [shape: f32[1,128], index: 4, kind: input, shape index: {}]
  %s5 = inlined_call_operand.vmem [shape: f32[1,128], index: 5, kind: input, shape index: {}]
  %s6 = inlined_call_operand.hbm [shape: bf16[128,128], index: 6, kind: output, shape index: {0}]
  %s7 = inlined_call_operand.vmem [shape: f32[128,1], index: 7, kind: output, shape index: {1}]
  %s8 = inlined_call_operand.vmem [shape: f32[128,1], index: 8, kind: output, shape index: {2}]
  %9 = xla_tuple %s6, %s7, %s8
  %s10 = sld [smem:[#allocation0]]
  $region58: #{tpu_custom_call.1} parent=0
    _
  %s12 = ssub.s32 1, %s10
  %s13 = scalar_select 0, %s12, %s10
  $region1: #{tpu_custom_call.1} parent=0
    #allocation2 [shape = 'u8[32768]{0}', space=vmem, size = 0x8000, scoped, tag = 'input window, operand 0, single buffered']
    #allocation3 [shape = 's32[1]{0}', space=sflag, size = 0x4, scoped, tag = 'scoped memory for tpu_custom_call.1']
    #allocation4 [shape = 's32[1]{0}', space=sflag, size = 0x4, scoped, tag = 'scoped memory for tpu_custom_call.1']
    #allocation5 [shape = 'u8[32768]{0}', space=vmem, size = 0x8000, scoped, tag = 'input window, operand 1, single buffered']
    #allocation6 [shape = 's32[1]{0}', space=sflag, size = 0x4, scoped, tag = 'scoped memory for tpu_custom_call.1']
    #allocation7 [shape = 'u8[32768]{0}', space=vmem, size = 0x8000, scoped, tag = 'output window, operand 0, single buffered']
    %14 = vsyncpa [#allocation3], 0
    %15 = vsyncpa [#allocation6], 0
    %16 = vsyncpa [#allocation4], 0
    // Predicated region
    $region2: #{tpu_custom_call.1} parent=1 // pred_check
      _
    $region3: #{tpu_custom_call.1} parent=1 // pred_check_branch
      %18 = sbr.rel (0) target = $region5
    $region4: #{tpu_custom_call.1} parent=1 // pred_region
      %s20 = ssub.s32 1024, 1024
      %21 = vsyncadd [#allocation3], %s20
      %s22 = sshll.u32 [#allocation2], 4
      %s23 = int_to_ptr.vmem [resolvable:$true] %s22
      %28 = dma.hbm_to_vmem [thread:$0]  %s0, 1024, %s23, [#allocation3], 64, 64, 4
    $region5: #{tpu_custom_call.1} parent=1 // pred_fallthru
      _
    // Predicated region
    $region6: #{tpu_custom_call.1} parent=1 // pred_check
      _
    $region7: #{tpu_custom_call.1} parent=1 // pred_check_branch
      %30 = sbr.rel (0) target = $region9
    $region8: #{tpu_custom_call.1} parent=1 // pred_region
      %s32 = ssub.s32 1024, 1024
      %33 = vsyncadd [#allocation6], %s32
      %s34 = sshll.u32 [#allocation5], 4
      %s35 = int_to_ptr.vmem [resolvable:$true] %s34
      %40 = dma.hbm_to_vmem [thread:$0]  %s1, 1024, %s35, [#allocation6], 64, 64, 4
    $region9: #{tpu_custom_call.1} parent=1 // pred_fallthru
      _
    // Predicated region
    $region10: #{tpu_custom_call.1} parent=1 // pred_check
      _
    $region11: #{tpu_custom_call.1} parent=1 // pred_check_branch
      %42 = sbr.rel (0) target = $region13
    $region12: #{tpu_custom_call.1} parent=1 // pred_region
      _
    $region13: #{tpu_custom_call.1} parent=1 // pred_fallthru
      _
    // Predicated region
    $region14: #{tpu_custom_call.1} parent=1 // pred_check
      _
    $region15: #{tpu_custom_call.1} parent=1 // pred_check_branch
      %44 = sbr.rel (0) target = $region17
    $region16: #{tpu_custom_call.1} parent=1 // pred_region
      _
    $region17: #{tpu_custom_call.1} parent=1 // pred_fallthru
      _
    // Predicated region
    $region18: #{tpu_custom_call.1} parent=1 // pred_check
      _
    $region19: #{tpu_custom_call.1} parent=1 // pred_check_branch
      %46 = sbr.rel (0) target = $region21
    $region20: #{tpu_custom_call.1} parent=1 // pred_region
      _
    $region21: #{tpu_custom_call.1} parent=1 // pred_fallthru
      _
    // Predicated region
    $region22: #{tpu_custom_call.1} parent=1 // pred_check
      _
    $region23: #{tpu_custom_call.1} parent=1 // pred_check_branch
      %48 = sbr.rel (0) target = $region25
    $region24: #{tpu_custom_call.1} parent=1 // pred_region
      _
    $region25: #{tpu_custom_call.1} parent=1 // pred_fallthru
      _
    // Predicated region
    $region26: #{tpu_custom_call.1} parent=1 // pred_check
      _
    $region27: #{tpu_custom_call.1} parent=1 // pred_check_branch
      %50 = sbr.rel (0) target = $region29
    $region28: #{tpu_custom_call.1} parent=1 // pred_region
      %51 = dma.done [#allocation3], 1024
    $region29: #{tpu_custom_call.1} parent=1 // pred_fallthru
      _
    // Predicated region
    $region30: #{tpu_custom_call.1} parent=1 // pred_check
      _
    $region31: #{tpu_custom_call.1} parent=1 // pred_check_branch
      %53 = sbr.rel (0) target = $region33
    $region32: #{tpu_custom_call.1} parent=1 // pred_region
      %54 = dma.done [#allocation6], 1024
    $region33: #{tpu_custom_call.1} parent=1 // pred_fallthru
      _
    %v56 = vld [vmem:[#allocation2] sm:$0xf]
    %v57 = vld [vmem:[#allocation2 + $0x4] sm:$0xf]
    %v58 = vld [vmem:[#allocation2 + $0x8] sm:$0xf]
    %v59 = vld [vmem:[#allocation2 + $0xc] sm:$0xf]
    %v60 = vld [vmem:[#allocation2 + $0x10] sm:$0xf]
    %v61 = vld [vmem:[#allocation2 + $0x14] sm:$0xf]
    %v62 = vld [vmem:[#allocation2 + $0x18] sm:$0xf]
    %v63 = vld [vmem:[#allocation2 + $0x1c] sm:$0xf]
    %v64 = vld [vmem:[#allocation2 + $0x20] sm:$0xf]
    %v65 = vld [vmem:[#allocation2 + $0x24] sm:$0xf]
    %v66 = vld [vmem:[#allocation2 + $0x28] sm:$0xf]
    %v67 = vld [vmem:[#allocation2 + $0x2c] sm:$0xf]
    %v68 = vld [vmem:[#allocation2 + $0x30] sm:$0xf]
    %v69 = vld [vmem:[#allocation2 + $0x34] sm:$0xf]
    %v70 = vld [vmem:[#allocation2 + $0x38] sm:$0xf]
    %v71 = vld [vmem:[#allocation2 + $0x3c] sm:$0xf]
    %v72 = vld [vmem:[#allocation5] sm:$0xf]
    %v73 = vld [vmem:[#allocation5 + $0x4] sm:$0xf]
    %v74 = vld [vmem:[#allocation5 + $0x8] sm:$0xf]
    %v75 = vld [vmem:[#allocation5 + $0xc] sm:$0xf]
    %v76 = vld [vmem:[#allocation5 + $0x10] sm:$0xf]
    %v77 = vld [vmem:[#allocation5 + $0x14] sm:$0xf]
    %v78 = vld [vmem:[#allocation5 + $0x18] sm:$0xf]
    %v79 = vld [vmem:[#allocation5 + $0x1c] sm:$0xf]
    %v80 = vld [vmem:[#allocation5 + $0x20] sm:$0xf]
    %v81 = vld [vmem:[#allocation5 + $0x24] sm:$0xf]
    %v82 = vld [vmem:[#allocation5 + $0x28] sm:$0xf]
    %v83 = vld [vmem:[#allocation5 + $0x2c] sm:$0xf]
    %v84 = vld [vmem:[#allocation5 + $0x30] sm:$0xf]
    %v85 = vld [vmem:[#allocation5 + $0x34] sm:$0xf]
    %v86 = vld [vmem:[#allocation5 + $0x38] sm:$0xf]
    %v87 = vld [vmem:[#allocation5 + $0x3c] sm:$0xf]
    %v104 = vunpack.c.l.b16 %v56
    %v105 = vunpack.c.l.b16 %v57
    %v106 = vunpack.c.l.b16 %v58
    %v107 = vunpack.c.l.b16 %v59
    %v108 = vunpack.c.l.b16 %v60
    %v109 = vunpack.c.l.b16 %v61
    %v110 = vunpack.c.l.b16 %v62
    %v111 = vunpack.c.l.b16 %v63
    %v112 = vunpack.c.l.b16 %v64
    %v113 = vunpack.c.l.b16 %v65
    %v114 = vunpack.c.l.b16 %v66
    %v115 = vunpack.c.l.b16 %v67
    %v116 = vunpack.c.l.b16 %v68
    %v117 = vunpack.c.l.b16 %v69
    %v118 = vunpack.c.l.b16 %v70
    %v119 = vunpack.c.l.b16 %v71
    %v120 = vpack.c.b16 %v105, %v104
    %v121 = vpack.c.b16 %v107, %v106
    %v122 = vpack.c.b16 %v109, %v108
    %v123 = vpack.c.b16 %v111, %v110
    %v124 = vpack.c.b16 %v113, %v112
    %v125 = vpack.c.b16 %v115, %v114
    %v126 = vpack.c.b16 %v117, %v116
    %v127 = vpack.c.b16 %v119, %v118
    %v152 = vunpack.c.l.b16 %v72
    %v153 = vunpack.c.l.b16 %v73
    %v154 = vunpack.c.l.b16 %v74
    %v155 = vunpack.c.l.b16 %v75
    %v156 = vunpack.c.l.b16 %v76
    %v157 = vunpack.c.l.b16 %v77
    %v158 = vunpack.c.l.b16 %v78
    %v159 = vunpack.c.l.b16 %v79
    %v160 = vunpack.c.l.b16 %v80
    %v161 = vunpack.c.l.b16 %v81
    %v162 = vunpack.c.l.b16 %v82
    %v163 = vunpack.c.l.b16 %v83
    %v164 = vunpack.c.l.b16 %v84
    %v165 = vunpack.c.l.b16 %v85
    %v166 = vunpack.c.l.b16 %v86
    %v167 = vunpack.c.l.b16 %v87
    %v168 = vpack.c.b16 %v153, %v152
    %v169 = vpack.c.b16 %v155, %v154
    %v170 = vpack.c.b16 %v157, %v156
    %v171 = vpack.c.b16 %v159, %v158
    %v172 = vpack.c.b16 %v161, %v160
    %v173 = vpack.c.b16 %v163, %v162
    %v174 = vpack.c.b16 %v165, %v164
    %v175 = vpack.c.b16 %v167, %v166
    %184 = vmatprep.subr.bf16.mxu0 0
    %185 = vmatpush1.bf16.msra.mxu0 %v168
    %186 = vmatprep.subr.bf16.mxu0 0
    %187 = vmatpush1.bf16.msra.mxu0 %v169
    %188 = vmatprep.subr.bf16.mxu0 0
    %189 = vmatpush1.bf16.msra.mxu0 %v170
    %190 = vmatprep.subr.bf16.mxu0 0
    %191 = vmatpush1.bf16.msra.mxu0 %v171
    %192 = vmatprep.subr.bf16.mxu0 0
    %193 = vmatpush1.bf16.msra.mxu0 %v172
    %194 = vmatprep.subr.bf16.mxu0 0
    %195 = vmatpush1.bf16.msra.mxu0 %v173
    %196 = vmatprep.subr.bf16.mxu0 0
    %197 = vmatpush1.bf16.msra.mxu0 %v174
    %198 = vmatprep.subr.bf16.mxu0 0
    %199 = vmatpush1.bf16.msra.mxu0 %v175
    %200 = vmatprep.subr.bf16.mxu0 0
    %201 = vmatpush1.bf16.msra.mxu0 0
    %202 = vmatprep.subr.bf16.mxu0 0
    %203 = vmatpush1.bf16.msra.mxu0 0
    %204 = vmatprep.subr.bf16.mxu0 0
    %205 = vmatpush1.bf16.msra.mxu0 0
    %206 = vmatprep.subr.bf16.mxu0 0
    %207 = vmatpush1.bf16.msra.mxu0 0
    %208 = vmatprep.subr.bf16.mxu0 0
    %209 = vmatpush1.bf16.msra.mxu0 0
    %210 = vmatprep.subr.bf16.mxu0 0
    %211 = vmatpush1.bf16.msra.mxu0 0
    %212 = vmatprep.subr.bf16.mxu0 0
    %213 = vmatpush1.bf16.msra.mxu0 0
    %214 = vmatprep.subr.bf16.mxu0 0
    %215 = vmatpush1.bf16.msra.mxu0 0
    %216 = vmatprep.mubr.bf16.mxu0 0
    %217 = vmatmul.mubr.bf16.gmra.mrb[0].mxu0 %v120
    %v218 = vpop.f32.mrb[0].mxu0
    %v219 = vadd.f32 0.0, %v218
    %v220 = vpop.f32.mrb[0].mxu0
    %v221 = vpop.f32.mrb[0].mxu0
    %v222 = vadd.f32 0.0, %v221
    %v223 = vpop.f32.mrb[0].mxu0
    %224 = vmatprep.mubr.bf16.mxu0 0
    %225 = vmatmul.mubr.bf16.gmra.mrb[0].mxu0 %v121
    %v226 = vpop.f32.mrb[0].mxu0
    %v227 = vadd.f32 0.0, %v226
    %v228 = vpop.f32.mrb[0].mxu0
    %v229 = vpop.f32.mrb[0].mxu0
    %v230 = vadd.f32 0.0, %v229
    %v231 = vpop.f32.mrb[0].mxu0
    %232 = vmatprep.mubr.bf16.mxu0 0
    %233 = vmatmul.mubr.bf16.gmra.mrb[0].mxu0 %v122
    %v234 = vpop.f32.mrb[0].mxu0
    %v235 = vadd.f32 0.0, %v234
    %v236 = vpop.f32.mrb[0].mxu0
    %v237 = vpop.f32.mrb[0].mxu0
    %v238 = vadd.f32 0.0, %v237
    %v239 = vpop.f32.mrb[0].mxu0
    %240 = vmatprep.mubr.bf16.mxu0 0
    %241 = vmatmul.mubr.bf16.gmra.mrb[0].mxu0 %v123
    %v242 = vpop.f32.mrb[0].mxu0
    %v243 = vadd.f32 0.0, %v242
    %v244 = vpop.f32.mrb[0].mxu0
    %v245 = vpop.f32.mrb[0].mxu0
    %v246 = vadd.f32 0.0, %v245
    %v247 = vpop.f32.mrb[0].mxu0
    %248 = vmatprep.mubr.bf16.mxu0 0
    %249 = vmatmul.mubr.bf16.gmra.mrb[0].mxu0 %v124
    %v250 = vpop.f32.mrb[0].mxu0
    %v251 = vadd.f32 0.0, %v250
    %v252 = vpop.f32.mrb[0].mxu0
    %v253 = vpop.f32.mrb[0].mxu0
    %v254 = vadd.f32 0.0, %v253
    %v255 = vpop.f32.mrb[0].mxu0
    %256 = vmatprep.mubr.bf16.mxu0 0
    %257 = vmatmul.mubr.bf16.gmra.mrb[0].mxu0 %v125
    %v258 = vpop.f32.mrb[0].mxu0
    %v259 = vadd.f32 0.0, %v258
    %v260 = vpop.f32.mrb[0].mxu0
    %v261 = vpop.f32.mrb[0].mxu0
    %v262 = vadd.f32 0.0, %v261
    %v263 = vpop.f32.mrb[0].mxu0
    %264 = vmatprep.mubr.bf16.mxu0 0
    %265 = vmatmul.mubr.bf16.gmra.mrb[0].mxu0 %v126
    %v266 = vpop.f32.mrb[0].mxu0
    %v267 = vadd.f32 0.0, %v266
    %v268 = vpop.f32.mrb[0].mxu0
    %v269 = vpop.f32.mrb[0].mxu0
    %v270 = vadd.f32 0.0, %v269
    %v271 = vpop.f32.mrb[0].mxu0
    %272 = vmatprep.mubr.bf16.mxu0 0
    %273 = vmatmul.mubr.bf16.gmra.mrb[0].mxu0 %v127
    %v274 = vpop.f32.mrb[0].mxu0
    %v275 = vadd.f32 0.0, %v274
    %v276 = vpop.f32.mrb[0].mxu0
    %v277 = vpop.f32.mrb[0].mxu0
    %v278 = vadd.f32 0.0, %v277
    %v279 = vpop.f32.mrb[0].mxu0
    %280 = vdwg.mxu0
    %v281 = vld [vmem:[%s2] sm:$0x1]
    %v283 = vlaneseq
    %v284 = vshrl.u32 %v283, 7
    %v285 = vsub.s32 0, %v284
    %v286 = vrot.slane %v281, %v285
    %v288 = vmul.f32 %v219, %v286
    %v289 = vmul.f32 %v222, %v286
    %v290 = vmul.f32 %v227, %v286
    %v291 = vmul.f32 %v230, %v286
    %v292 = vmul.f32 %v235, %v286
    %v293 = vmul.f32 %v238, %v286
    %v294 = vmul.f32 %v243, %v286
    %v295 = vmul.f32 %v246, %v286
    %v296 = vmul.f32 %v251, %v286
    %v297 = vmul.f32 %v254, %v286
    %v298 = vmul.f32 %v259, %v286
    %v299 = vmul.f32 %v262, %v286
    %v300 = vmul.f32 %v267, %v286
    %v301 = vmul.f32 %v270, %v286
    %v302 = vmul.f32 %v275, %v286
    %v303 = vmul.f32 %v278, %v286
    %304 = vadd.xlane.f32.xlu0 %v288
    %v305 = vpop.xlane.xlu0 %304
    %306 = vadd.xlane.f32.xlu0 %v289
    %v307 = vpop.xlane.xlu0 %306
    %308 = vadd.xlane.f32.xlu0 %v290
    %v309 = vpop.xlane.xlu0 %308
    %310 = vadd.xlane.f32.xlu0 %v291
    %v311 = vpop.xlane.xlu0 %310
    %312 = vadd.xlane.f32.xlu0 %v292
    %v313 = vpop.xlane.xlu0 %312
    %314 = vadd.xlane.f32.xlu0 %v293
    %v315 = vpop.xlane.xlu0 %314
    %316 = vadd.xlane.f32.xlu0 %v294
    %v317 = vpop.xlane.xlu0 %316
    %318 = vadd.xlane.f32.xlu0 %v295
    %v319 = vpop.xlane.xlu0 %318
    %320 = vadd.xlane.f32.xlu0 %v296
    %v321 = vpop.xlane.xlu0 %320
    %322 = vadd.xlane.f32.xlu0 %v297
    %v323 = vpop.xlane.xlu0 %322
    %324 = vadd.xlane.f32.xlu0 %v298
    %v325 = vpop.xlane.xlu0 %324
    %326 = vadd.xlane.f32.xlu0 %v299
    %v327 = vpop.xlane.xlu0 %326
    %328 = vadd.xlane.f32.xlu0 %v300
    %v329 = vpop.xlane.xlu0 %328
    %330 = vadd.xlane.f32.xlu0 %v301
    %v331 = vpop.xlane.xlu0 %330
    %332 = vadd.xlane.f32.xlu0 %v302
    %v333 = vpop.xlane.xlu0 %332
    %334 = vadd.xlane.f32.xlu0 %v303
    %v335 = vpop.xlane.xlu0 %334
    %vm336 = vcmask 7168
    %337 = vst.msk [vmem:[%s7] sm:$0xff] %vm336, %v305
    %338 = vst.msk [vmem:[%s7 + $0x8] sm:$0xff] %vm336, %v307
    %339 = vst.msk [vmem:[%s7 + $0x10] sm:$0xff] %vm336, %v309
    %340 = vst.msk [vmem:[%s7 + $0x18] sm:$0xff] %vm336, %v311
    %341 = vst.msk [vmem:[%s7 + $0x20] sm:$0xff] %vm336, %v313
    %342 = vst.msk [vmem:[%s7 + $0x28] sm:$0xff] %vm336, %v315
    %343 = vst.msk [vmem:[%s7 + $0x30] sm:$0xff] %vm336, %v317
    %344 = vst.msk [vmem:[%s7 + $0x38] sm:$0xff] %vm336, %v319
    %345 = vst.msk [vmem:[%s7 + $0x40] sm:$0xff] %vm336, %v321
    %346 = vst.msk [vmem:[%s7 + $0x48] sm:$0xff] %vm336, %v323
    %347 = vst.msk [vmem:[%s7 + $0x50] sm:$0xff] %vm336, %v325
    %348 = vst.msk [vmem:[%s7 + $0x58] sm:$0xff] %vm336, %v327
    %349 = vst.msk [vmem:[%s7 + $0x60] sm:$0xff] %vm336, %v329
    %350 = vst.msk [vmem:[%s7 + $0x68] sm:$0xff] %vm336, %v331
    %351 = vst.msk [vmem:[%s7 + $0x70] sm:$0xff] %vm336, %v333
    %352 = vst.msk [vmem:[%s7 + $0x78] sm:$0xff] %vm336, %v335
    %v353 = vld [vmem:[%s3] sm:$0x1]
    %v355 = vlaneseq
    %v356 = vshrl.u32 %v355, 7
    %v357 = vsub.s32 0, %v356
    %v358 = vrot.slane %v353, %v357
    %v360 = vmul.f32 %v219, %v358
    %v361 = vmul.f32 %v222, %v358
    %v362 = vmul.f32 %v227, %v358
    %v363 = vmul.f32 %v230, %v358
    %v364 = vmul.f32 %v235, %v358
    %v365 = vmul.f32 %v238, %v358
    %v366 = vmul.f32 %v243, %v358
    %v367 = vmul.f32 %v246, %v358
    %v368 = vmul.f32 %v251, %v358
    %v369 = vmul.f32 %v254, %v358
    %v370 = vmul.f32 %v259, %v358
    %v371 = vmul.f32 %v262, %v358
    %v372 = vmul.f32 %v267, %v358
    %v373 = vmul.f32 %v270, %v358
    %v374 = vmul.f32 %v275, %v358
    %v375 = vmul.f32 %v278, %v358
    %376 = vadd.xlane.f32.xlu0 %v360
    %v377 = vpop.xlane.xlu0 %376
    %378 = vadd.xlane.f32.xlu0 %v361
    %v379 = vpop.xlane.xlu0 %378
    %380 = vadd.xlane.f32.xlu0 %v362
    %v381 = vpop.xlane.xlu0 %380
    %382 = vadd.xlane.f32.xlu0 %v363
    %v383 = vpop.xlane.xlu0 %382
    %384 = vadd.xlane.f32.xlu0 %v364
    %v385 = vpop.xlane.xlu0 %384
    %386 = vadd.xlane.f32.xlu0 %v365
    %v387 = vpop.xlane.xlu0 %386
    %388 = vadd.xlane.f32.xlu0 %v366
    %v389 = vpop.xlane.xlu0 %388
    %390 = vadd.xlane.f32.xlu0 %v367
    %v391 = vpop.xlane.xlu0 %390
    %392 = vadd.xlane.f32.xlu0 %v368
    %v393 = vpop.xlane.xlu0 %392
    %394 = vadd.xlane.f32.xlu0 %v369
    %v395 = vpop.xlane.xlu0 %394
    %396 = vadd.xlane.f32.xlu0 %v370
    %v397 = vpop.xlane.xlu0 %396
    %398 = vadd.xlane.f32.xlu0 %v371
    %v399 = vpop.xlane.xlu0 %398
    %400 = vadd.xlane.f32.xlu0 %v372
    %v401 = vpop.xlane.xlu0 %400
    %402 = vadd.xlane.f32.xlu0 %v373
    %v403 = vpop.xlane.xlu0 %402
    %404 = vadd.xlane.f32.xlu0 %v374
    %v405 = vpop.xlane.xlu0 %404
    %406 = vadd.xlane.f32.xlu0 %v375
    %v407 = vpop.xlane.xlu0 %406
    %408 = vst.msk [vmem:[%s8] sm:$0xff] %vm336, %v377
    %409 = vst.msk [vmem:[%s8 + $0x8] sm:$0xff] %vm336, %v379
    %410 = vst.msk [vmem:[%s8 + $0x10] sm:$0xff] %vm336, %v381
    %411 = vst.msk [vmem:[%s8 + $0x18] sm:$0xff] %vm336, %v383
    %412 = vst.msk [vmem:[%s8 + $0x20] sm:$0xff] %vm336, %v385
    %413 = vst.msk [vmem:[%s8 + $0x28] sm:$0xff] %vm336, %v387
    %414 = vst.msk [vmem:[%s8 + $0x30] sm:$0xff] %vm336, %v389
    %415 = vst.msk [vmem:[%s8 + $0x38] sm:$0xff] %vm336, %v391
    %416 = vst.msk [vmem:[%s8 + $0x40] sm:$0xff] %vm336, %v393
    %417 = vst.msk [vmem:[%s8 + $0x48] sm:$0xff] %vm336, %v395
    %418 = vst.msk [vmem:[%s8 + $0x50] sm:$0xff] %vm336, %v397
    %419 = vst.msk [vmem:[%s8 + $0x58] sm:$0xff] %vm336, %v399
    %420 = vst.msk [vmem:[%s8 + $0x60] sm:$0xff] %vm336, %v401
    %421 = vst.msk [vmem:[%s8 + $0x68] sm:$0xff] %vm336, %v403
    %422 = vst.msk [vmem:[%s8 + $0x70] sm:$0xff] %vm336, %v405
    %423 = vst.msk [vmem:[%s8 + $0x78] sm:$0xff] %vm336, %v407
    %v424 = vld [vmem:[%s4] sm:$0x1]
    %v426 = vlaneseq
    %v427 = vshrl.u32 %v426, 7
    %v428 = vsub.s32 0, %v427
    %v429 = vrot.slane %v424, %v428
    %v431 = vmul.f32 %v219, %v429
    %v432 = vmul.f32 %v222, %v429
    %v433 = vmul.f32 %v227, %v429
    %v434 = vmul.f32 %v230, %v429
    %v435 = vmul.f32 %v235, %v429
    %v436 = vmul.f32 %v238, %v429
    %v437 = vmul.f32 %v243, %v429
    %v438 = vmul.f32 %v246, %v429
    %v439 = vmul.f32 %v251, %v429
    %v440 = vmul.f32 %v254, %v429
    %v441 = vmul.f32 %v259, %v429
    %v442 = vmul.f32 %v262, %v429
    %v443 = vmul.f32 %v267, %v429
    %v444 = vmul.f32 %v270, %v429
    %v445 = vmul.f32 %v275, %v429
    %v446 = vmul.f32 %v278, %v429
    %v447 = vld [vmem:[%s5] sm:$0x1]
    %v449 = vlaneseq
    %v450 = vshrl.u32 %v449, 7
    %v451 = vsub.s32 0, %v450
    %v452 = vrot.slane %v447, %v451
    %v454 = vadd.f32 %v431, %v452
    %v455 = vadd.f32 %v432, %v452
    %v456 = vadd.f32 %v433, %v452
    %v457 = vadd.f32 %v434, %v452
    %v458 = vadd.f32 %v435, %v452
    %v459 = vadd.f32 %v436, %v452
    %v460 = vadd.f32 %v437, %v452
    %v461 = vadd.f32 %v438, %v452
    %v462 = vadd.f32 %v439, %v452
    %v463 = vadd.f32 %v440, %v452
    %v464 = vadd.f32 %v441, %v452
    %v465 = vadd.f32 %v442, %v452
    %v466 = vadd.f32 %v443, %v452
    %v467 = vadd.f32 %v444, %v452
    %v468 = vadd.f32 %v445, %v452
    %v469 = vadd.f32 %v446, %v452
    %v470 = vpack.c.bf16 %v455, %v454
    %v471 = vpack.c.bf16 %v457, %v456
    %v472 = vpack.c.bf16 %v459, %v458
    %v473 = vpack.c.bf16 %v461, %v460
    %v474 = vpack.c.bf16 %v463, %v462
    %v475 = vpack.c.bf16 %v465, %v464
    %v476 = vpack.c.bf16 %v467, %v466
    %v477 = vpack.c.bf16 %v469, %v468
    %v486 = vunpack.c.l.b16 %v470
    %v487 = vunpack.c.h.b16 %v470
    %v488 = vunpack.c.l.b16 %v471
    %v489 = vunpack.c.h.b16 %v471
    %v490 = vunpack.c.l.b16 %v472
    %v491 = vunpack.c.h.b16 %v472
    %v492 = vunpack.c.l.b16 %v473
    %v493 = vunpack.c.h.b16 %v473
    %v494 = vunpack.c.l.b16 %v474
    %v495 = vunpack.c.h.b16 %v474
    %v496 = vunpack.c.l.b16 %v475
    %v497 = vunpack.c.h.b16 %v475
    %v498 = vunpack.c.l.b16 %v476
    %v499 = vunpack.c.h.b16 %v476
    %v500 = vunpack.c.l.b16 %v477
    %v501 = vunpack.c.h.b16 %v477
    %v502 = vpack.c.b16 %v486, %v486
    %v503 = vpack.c.b16 %v487, %v487
    %v504 = vpack.c.b16 %v488, %v488
    %v505 = vpack.c.b16 %v489, %v489
    %v506 = vpack.c.b16 %v490, %v490
    %v507 = vpack.c.b16 %v491, %v491
    %v508 = vpack.c.b16 %v492, %v492
    %v509 = vpack.c.b16 %v493, %v493
    %v510 = vpack.c.b16 %v494, %v494
    %v511 = vpack.c.b16 %v495, %v495
    %v512 = vpack.c.b16 %v496, %v496
    %v513 = vpack.c.b16 %v497, %v497
    %v514 = vpack.c.b16 %v498, %v498
    %v515 = vpack.c.b16 %v499, %v499
    %v516 = vpack.c.b16 %v500, %v500
    %v517 = vpack.c.b16 %v501, %v501
    %534 = vst [vmem:[#allocation7] sm:$0xf] %v502
    %535 = vst [vmem:[#allocation7 + $0x4] sm:$0xf] %v503
    %536 = vst [vmem:[#allocation7 + $0x8] sm:$0xf] %v504
    %537 = vst [vmem:[#allocation7 + $0xc] sm:$0xf] %v505
    %538 = vst [vmem:[#allocation7 + $0x10] sm:$0xf] %v506
    %539 = vst [vmem:[#allocation7 + $0x14] sm:$0xf] %v507
    %540 = vst [vmem:[#allocation7 + $0x18] sm:$0xf] %v508
    %541 = vst [vmem:[#allocation7 + $0x1c] sm:$0xf] %v509
    %542 = vst [vmem:[#allocation7 + $0x20] sm:$0xf] %v510
    %543 = vst [vmem:[#allocation7 + $0x24] sm:$0xf] %v511
    %544 = vst [vmem:[#allocation7 + $0x28] sm:$0xf] %v512
    %545 = vst [vmem:[#allocation7 + $0x2c] sm:$0xf] %v513
    %546 = vst [vmem:[#allocation7 + $0x30] sm:$0xf] %v514
    %547 = vst [vmem:[#allocation7 + $0x34] sm:$0xf] %v515
    %548 = vst [vmem:[#allocation7 + $0x38] sm:$0xf] %v516
    %549 = vst [vmem:[#allocation7 + $0x3c] sm:$0xf] %v517
    // Predicated region
    $region34: #{tpu_custom_call.1} parent=1 // pred_check
      _
    $region35: #{tpu_custom_call.1} parent=1 // pred_check_branch
      %551 = sbr.rel (0) target = $region37
    $region36: #{tpu_custom_call.1} parent=1 // pred_region
      %s553 = ssub.s32 1024, 1024
      %554 = vsyncadd [#allocation4], %s553
      %s555 = sshll.u32 [#allocation7], 4
      %s556 = int_to_ptr.vmem [resolvable:$true] %s555
      %561 = dma.vmem_to_hbm [thread:$0]  %s556, 1024, %s6, [#allocation4], 64, 64, 4
    $region37: #{tpu_custom_call.1} parent=1 // pred_fallthru
      _
    // Predicated region
    $region38: #{tpu_custom_call.1} parent=1 // pred_check
      _
    $region39: #{tpu_custom_call.1} parent=1 // pred_check_branch
      %563 = sbr.rel (0) target = $region41
    $region40: #{tpu_custom_call.1} parent=1 // pred_region
      _
    $region41: #{tpu_custom_call.1} parent=1 // pred_fallthru
      _
    // Predicated region
    $region42: #{tpu_custom_call.1} parent=1 // pred_check
      _
    $region43: #{tpu_custom_call.1} parent=1 // pred_check_branch
      %565 = sbr.rel (0) target = $region45
    $region44: #{tpu_custom_call.1} parent=1 // pred_region
      _
    $region45: #{tpu_custom_call.1} parent=1 // pred_fallthru
      _
    // Predicated region
    $region46: #{tpu_custom_call.1} parent=1 // pred_check
      _
    $region47: #{tpu_custom_call.1} parent=1 // pred_check_branch
      %567 = sbr.rel (0) target = $region49
    $region48: #{tpu_custom_call.1} parent=1 // pred_region
      %568 = dma.done [#allocation4], 1024
    $region49: #{tpu_custom_call.1} parent=1 // pred_fallthru
      _
    // Predicated region
    $region50: #{tpu_custom_call.1} parent=1 // pred_check
      _
    $region51: #{tpu_custom_call.1} parent=1 // pred_check_branch
      %570 = sbr.rel (0) target = $region53
    $region52: #{tpu_custom_call.1} parent=1 // pred_region
      _
    $region53: #{tpu_custom_call.1} parent=1 // pred_fallthru
      _
    // Predicated region
    $region54: #{tpu_custom_call.1} parent=1 // pred_check
      _
    $region55: #{tpu_custom_call.1} parent=1 // pred_check_branch
      %572 = sbr.rel (0) target = $region57
    $region56: #{tpu_custom_call.1} parent=1 // pred_region
      _
    $region57: #{tpu_custom_call.1} parent=1 // pred_fallthru
      _
    %573 = vsyncpa [#allocation3], 1
    %574 = vsyncpa [#allocation6], 1
    %575 = vsyncpa [#allocation4], 1

</llo_original>
